<compile_context>
chip_gen: v7x
topology: tpu7x:2x2x1
jax: 0.10.0
libtpu: 0.0.40
codegen_flags: <defaults>
</compile_context>

<pallas_src>
import math

import jax
import jax.numpy as jnp
from jax.experimental import pallas as pl
from jax.experimental.pallas import tpu as pltpu


def _spatial_fuse_kernel(x_ref, xr_ref, w1a_ref, w1b_ref, b1_ref,
                         w2_ref, b2_ref, o_ref):
    # x_ref / xr_ref: (1, C, T) blocks — channels on sublanes, spatial on lanes.
    x = x_ref[0]                       # (C, T)
    xr = xr_ref[0]                     # (C, T)

    # First 1x1 conv on the (virtual) concatenation:
    #   W1 @ [x; xr] == W1[:, :C] @ x + W1[:, C:] @ xr
    h = (jnp.dot(w1a_ref[...], x, preferred_element_type=jnp.float32)
         + jnp.dot(w1b_ref[...], xr, preferred_element_type=jnp.float32)
         + b1_ref[...].astype(jnp.float32))            # (C, T) f32

    # LeakyReLU(negative_slope=0.1), in f32 on the VPU.
    h = jnp.where(h >= 0, h, 0.1 * h)

    # Second 1x1 conv; keep accumulation in f32.
    y = (jnp.dot(w2_ref[...].astype(jnp.float32), h,
                 preferred_element_type=jnp.float32)
         + b2_ref[...].astype(jnp.float32))            # (C, T) f32

    o_ref[0] = y.astype(o_ref.dtype)


def _pick_tile(hw_pad, target):
    """Largest multiple of 128 that divides hw_pad and is <= max(target, 128)."""
    target = max(128, (target // 128) * 128)
    if hw_pad <= target:
        return hw_pad
    best, d = 128, 128
    while d <= target:
        if hw_pad % d == 0:
            best = d
        d += 128
    return best


def spatial_fuse(x, x_ref, w1, b1, w2, b2, *, tile_hw=2048, compute_dtype=None):
    """x, x_ref: (N, C, H, W).  w1: (C, 2C), w2: (C, C), b1/b2: (C,)
    (PyTorch Conv2d 1x1 weights with the trailing 1x1 spatial dims squeezed).

    compute_dtype: optional HBM/MXU dtype for activations & weights
    (e.g. jnp.bfloat16 on v5e/v6e/v7x); accumulation stays in f32."""
    N, C, H, W = x.shape
    assert x_ref.shape == x.shape
    HW = H * W
    orig_dtype = x.dtype
    io_dtype = orig_dtype if compute_dtype is None else compute_dtype

    # Channels-on-sublanes / spatial-on-lanes slabs straight from NCHW.
    # Reshape is free (contiguous); no transpose, no concat.
    xf = x.reshape(N, C, HW).astype(io_dtype)
    xrf = x_ref.reshape(N, C, HW).astype(io_dtype)

    # Pad the spatial (lane) axis up to a multiple of 128 only if needed
    # (no-op for the shapes used here).
    hw_pad = ((HW + 127) // 128) * 128
    if hw_pad != HW:
        pad = ((0, 0), (0, 0), (0, hw_pad - HW))
        xf = jnp.pad(xf, pad)
        xrf = jnp.pad(xrf, pad)

    t_hw = _pick_tile(hw_pad, tile_hw)
    grid = (N, hw_pad // t_hw)

    # Split W1 so the channel concat never materializes:
    #   W1 @ [x; xr] = W1[:, :C] @ x + W1[:, C:] @ xr
    w1a = w1[:, :C].astype(io_dtype)
    w1b = w1[:, C:].astype(io_dtype)
    w2m = w2.astype(io_dtype)
    b1m = b1.reshape(C, 1).astype(jnp.float32)
    b2m = b2.reshape(C, 1).astype(jnp.float32)

    itemsize = jnp.dtype(io_dtype).itemsize
    rows = N * HW
    cost = pl.CostEstimate(
        flops=rows * 6 * C * C,                       # 2*rows*2C*C + 2*rows*C*C
        transcendentals=0,
        bytes_accessed=rows * 3 * C * itemsize + (3 * C * C + 2 * C) * 4,
    )

    # NOTE: weights/biases use a constant index_map so they stay VMEM-resident
    # across the grid.  For production C (>=128), consider
    # pipeline_mode=pl.Buffered(1) on their BlockSpecs and an explicit
    # vmem_limit_bytes so tiles fit v7x's 64 MiB VMEM.
    out_flat = pl.pallas_call(
        _spatial_fuse_kernel,
        out_shape=jax.ShapeDtypeStruct((N, C, hw_pad), io_dtype),
        grid_spec=pltpu.PrefetchScalarGridSpec(
            num_scalar_prefetch=0,
            grid=grid,
            in_specs=[
                pl.BlockSpec((1, C, t_hw), lambda n, j: (n, 0, j)),   # x
                pl.BlockSpec((1, C, t_hw), lambda n, j: (n, 0, j)),   # x_ref
                pl.BlockSpec((C, C), lambda n, j: (0, 0)),            # w1a
                pl.BlockSpec((C, C), lambda n, j: (0, 0)),            # w1b
                pl.BlockSpec((C, 1), lambda n, j: (0, 0)),            # b1
                pl.BlockSpec((C, C), lambda n, j: (0, 0)),            # w2
                pl.BlockSpec((C, 1), lambda n, j: (0, 0)),            # b2
            ],
            out_specs=pl.BlockSpec((1, C, t_hw), lambda n, j: (n, 0, j)),
        ),
        compiler_params=pltpu.CompilerParams(
            dimension_semantics=("parallel", "parallel")),
        cost_estimate=cost,
    )(xf, xrf, w1a, w1b, b1m, w2m, b2m)

    out = out_flat[:, :, :HW].reshape(N, C, H, W)
    if out.dtype != orig_dtype:
        out = out.astype(orig_dtype)
    return out


def _reference(x, x_ref, w1, b1, w2, b2):
    # Pure-JAX reference of the PyTorch forward (NCHW, 1x1 convs as matmuls).
    cat = jnp.concatenate([x, x_ref], axis=1)           # (N, 2C, H, W)
    N, C2, H, W = cat.shape
    C = C2 // 2
    flat = cat.transpose(0, 2, 3, 1).reshape(-1, C2)
    h = flat @ w1.T + b1
    h = jnp.where(h >= 0, h, 0.1 * h)
    y = h @ w2.T + b2
    return y.reshape(N, H, W, C).transpose(0, 3, 1, 2)


if __name__ == "__main__":
    key = jax.random.PRNGKey(0)
    N, C, H, W = 2, 4, 16, 16

    k_x, k_xr, k_w1, k_b1, k_w2, k_b2 = jax.random.split(key, 6)
    x = jax.random.normal(k_x, (N, C, H, W), dtype=jnp.float32)
    x_r = jax.random.normal(k_xr, (N, C, H, W), dtype=jnp.float32)

    # Conv2d(2C, C, 1) and Conv2d(C, C, 1) weights with 1x1 dims squeezed.
    w1 = 0.1 * jax.random.normal(k_w1, (C, 2 * C), dtype=jnp.float32)
    b1 = 0.1 * jax.random.normal(k_b1, (C,), dtype=jnp.float32)
    w2 = 0.1 * jax.random.normal(k_w2, (C, C), dtype=jnp.float32)
    b2 = 0.1 * jax.random.normal(k_b2, (C,), dtype=jnp.float32)

    ref = _reference(x, x_r, w1, b1, w2, b2)

    # f32 path (exact vs reference).
    out = spatial_fuse(x, x_r, w1, b1, w2, b2)
    out = jax.block_until_ready(out)
    assert out.shape == (N, C, H, W)
    assert jnp.allclose(out, ref, atol=1e-5, rtol=1e-5)

    # bf16-in-HBM path (v5e/v6e/v7x bandwidth optimization), f32 accumulation.
    out_bf = spatial_fuse(x, x_r, w1, b1, w2, b2, compute_dtype=jnp.bfloat16)
    out_bf = jax.block_until_ready(out_bf)
    assert out_bf.shape == (N, C, H, W)
    assert jnp.allclose(out_bf.astype(jnp.float32), ref, atol=5e-2, rtol=5e-2)

    print("KERNEL_OK")
</pallas_src>

<mosaic_0001>
module attributes {stable_mosaic.version = 11 : i64} {
  func.func @_spatial_fuse_kernel(%arg0: i32, %arg1: i32, %arg2: memref<1x4x256xf32, #tpu.memory_space<vmem>>, %arg3: memref<1x4x256xf32, #tpu.memory_space<vmem>>, %arg4: memref<4x4xf32, #tpu.memory_space<vmem>>, %arg5: memref<4x4xf32, #tpu.memory_space<vmem>>, %arg6: memref<4x1xf32, #tpu.memory_space<vmem>>, %arg7: memref<4x4xf32, #tpu.memory_space<vmem>>, %arg8: memref<4x1xf32, #tpu.memory_space<vmem>>, %arg9: memref<1x4x256xf32, #tpu.memory_space<vmem>>) attributes {dimension_semantics = [#tpu.dimension_semantics<parallel>, #tpu.dimension_semantics<parallel>], iteration_bounds = array<i64: 2, 1>, scalar_prefetch = 0 : i64, scratch_operands = 0 : i64, tpu.core_type = #tpu.core_type<tc>, window_params = [{transform_indices = @transform_0, window_bounds = array<i64: 1, 4, 256>}, {transform_indices = @transform_1, window_bounds = array<i64: 1, 4, 256>}, {pipeline_mode = #tpu.pipeline_mode<synchronous>, transform_indices = @transform_2, window_bounds = array<i64: 4, 4>}, {pipeline_mode = #tpu.pipeline_mode<synchronous>, transform_indices = @transform_3, window_bounds = array<i64: 4, 4>}, {pipeline_mode = #tpu.pipeline_mode<synchronous>, transform_indices = @transform_4, window_bounds = array<i64: 4, 1>}, {pipeline_mode = #tpu.pipeline_mode<synchronous>, transform_indices = @transform_5, window_bounds = array<i64: 4, 4>}, {pipeline_mode = #tpu.pipeline_mode<synchronous>, transform_indices = @transform_6, window_bounds = array<i64: 4, 1>}, {transform_indices = @transform_7, window_bounds = array<i64: 1, 4, 256>}]} {
    %c0 = arith.constant 0 : index
    %c0_0 = arith.constant 0 : index
    %c0_1 = arith.constant 0 : index
    %0 = vector.load %arg2[%c0, %c0_0, %c0_1] : memref<1x4x256xf32, #tpu.memory_space<vmem>>, vector<1x4x256xf32>
    %1 = vector.shape_cast %0 : vector<1x4x256xf32> to vector<4x256xf32>
    %c0_2 = arith.constant 0 : index
    %c0_3 = arith.constant 0 : index
    %c0_4 = arith.constant 0 : index
    %2 = vector.load %arg3[%c0_2, %c0_3, %c0_4] : memref<1x4x256xf32, #tpu.memory_space<vmem>>, vector<1x4x256xf32>
    %3 = vector.shape_cast %2 : vector<1x4x256xf32> to vector<4x256xf32>
    %c0_5 = arith.constant 0 : index
    %c0_6 = arith.constant 0 : index
    %4 = vector.load %arg4[%c0_5, %c0_6] : memref<4x4xf32, #tpu.memory_space<vmem>>, vector<4x4xf32>
    %cst = arith.constant dense<0.000000e+00> : vector<4x256xf32>
    %5 = tpu.matmul %4, %1, %cst {dimension_numbers = #tpu.dot_dimension_numbers<[1], [0], [0], [1], [0, 0, 1, 1], [], []>} : vector<4x4xf32>, vector<4x256xf32>, vector<4x256xf32> -> vector<4x256xf32>
    %c0_7 = arith.constant 0 : index
    %c0_8 = arith.constant 0 : index
    %6 = vector.load %arg5[%c0_7, %c0_8] : memref<4x4xf32, #tpu.memory_space<vmem>>, vector<4x4xf32>
    %cst_9 = arith.constant dense<0.000000e+00> : vector<4x256xf32>
    %7 = tpu.matmul %6, %3, %cst_9 {dimension_numbers = #tpu.dot_dimension_numbers<[1], [0], [0], [1], [0, 0, 1, 1], [], []>} : vector<4x4xf32>, vector<4x256xf32>, vector<4x256xf32> -> vector<4x256xf32>
    %8 = arith.addf %5, %7 : vector<4x256xf32>
    %c0_10 = arith.constant 0 : index
    %c0_11 = arith.constant 0 : index
    %9 = vector.load %arg6[%c0_10, %c0_11] : memref<4x1xf32, #tpu.memory_space<vmem>>, vector<4x1xf32>
    %10 = vector.broadcast %9 : vector<4x1xf32> to vector<4x256xf32>
    %11 = arith.addf %8, %10 : vector<4x256xf32>
    %cst_12 = arith.constant 0.000000e+00 : f32
    %12 = vector.broadcast %cst_12 : f32 to vector<4x256xf32>
    %13 = arith.cmpf oge, %11, %12 : vector<4x256xf32>
    %cst_13 = arith.constant 1.000000e-01 : f32
    %14 = vector.broadcast %cst_13 : f32 to vector<4x256xf32>
    %15 = arith.mulf %14, %11 : vector<4x256xf32>
    %16 = arith.select %13, %11, %15 : vector<4x256xi1>, vector<4x256xf32>
    %c0_14 = arith.constant 0 : index
    %c0_15 = arith.constant 0 : index
    %17 = vector.load %arg7[%c0_14, %c0_15] : memref<4x4xf32, #tpu.memory_space<vmem>>, vector<4x4xf32>
    %cst_16 = arith.constant dense<0.000000e+00> : vector<4x256xf32>
    %18 = tpu.matmul %17, %16, %cst_16 {dimension_numbers = #tpu.dot_dimension_numbers<[1], [0], [0], [1], [0, 0, 1, 1], [], []>} : vector<4x4xf32>, vector<4x256xf32>, vector<4x256xf32> -> vector<4x256xf32>
    %c0_17 = arith.constant 0 : index
    %c0_18 = arith.constant 0 : index
    %19 = vector.load %arg8[%c0_17, %c0_18] : memref<4x1xf32, #tpu.memory_space<vmem>>, vector<4x1xf32>
    %20 = vector.broadcast %19 : vector<4x1xf32> to vector<4x256xf32>
    %21 = arith.addf %18, %20 : vector<4x256xf32>
    %c0_19 = arith.constant 0 : index
    %c0_20 = arith.constant 0 : index
    %c0_21 = arith.constant 0 : index
    %22 = vector.load %arg9[%c0_19, %c0_20, %c0_21] : memref<1x4x256xf32, #tpu.memory_space<vmem>>, vector<1x4x256xf32>
    %23 = vector.shape_cast %22 : vector<1x4x256xf32> to vector<4x256xf32>
    %24 = vector.shape_cast %21 : vector<4x256xf32> to vector<1x4x256xf32>
    tpu.vector_store %arg9[%c0_19, %c0_20, %c0_21], %24 {strides = array<i32>} : memref<1x4x256xf32, #tpu.memory_space<vmem>>, vector<1x4x256xf32>,
    return
  }
  func.func @transform_0(%arg0: i32, %arg1: i32) -> (i32, i32, i32) {
    %c0_i32 = arith.constant 0 : i32
    %c0_i32_0 = arith.constant 0 : i32
    return %arg0, %c0_i32, %arg1 : i32, i32, i32
  }
  func.func @transform_1(%arg0: i32, %arg1: i32) -> (i32, i32, i32) {
    %c0_i32 = arith.constant 0 : i32
    %c0_i32_0 = arith.constant 0 : i32
    return %arg0, %c0_i32, %arg1 : i32, i32, i32
  }
  func.func @transform_2(%arg0: i32, %arg1: i32) -> (i32, i32) {
    %c0_i32 = arith.constant 0 : i32
    %c0_i32_0 = arith.constant 0 : i32
    %c0_i32_1 = arith.constant 0 : i32
    return %c0_i32, %c0_i32_0 : i32, i32
  }
  func.func @transform_3(%arg0: i32, %arg1: i32) -> (i32, i32) {
    %c0_i32 = arith.constant 0 : i32
    %c0_i32_0 = arith.constant 0 : i32
    %c0_i32_1 = arith.constant 0 : i32
    return %c0_i32, %c0_i32_0 : i32, i32
  }
  func.func @transform_4(%arg0: i32, %arg1: i32) -> (i32, i32) {
    %c0_i32 = arith.constant 0 : i32
    %c0_i32_0 = arith.constant 0 : i32
    %c0_i32_1 = arith.constant 0 : i32
    return %c0_i32, %c0_i32_0 : i32, i32
  }
  func.func @transform_5(%arg0: i32, %arg1: i32) -> (i32, i32) {
    %c0_i32 = arith.constant 0 : i32
    %c0_i32_0 = arith.constant 0 : i32
    %c0_i32_1 = arith.constant 0 : i32
    return %c0_i32, %c0_i32_0 : i32, i32
  }
  func.func @transform_6(%arg0: i32, %arg1: i32) -> (i32, i32) {
    %c0_i32 = arith.constant 0 : i32
    %c0_i32_0 = arith.constant 0 : i32
    %c0_i32_1 = arith.constant 0 : i32
    return %c0_i32, %c0_i32_0 : i32, i32
  }
  func.func @transform_7(%arg0: i32, %arg1: i32) -> (i32, i32, i32) {
    %c0_i32 = arith.constant 0 : i32
    %c0_i32_0 = arith.constant 0 : i32
    return %arg0, %c0_i32, %arg1 : i32, i32, i32
  }
}

</mosaic_0001>

<llo_original>
// kernel: tpu_custom_call.1
$region0: #{tpu_custom_call.1}
  #allocation0 [shape = 'u32[]', space=smem, size = 0x4, offset = 0x4, fixed_abs, tag = 'smem constant byte address 0x4 - core index']
  #allocation1 [shape = 'u32[144,128]{1,0:T(1,128)}', space=vmem, size = 0x12000, scoped, tag = 'internal scratch']
  %s0 = inlined_call_operand.hbm [shape: f32[2,4,256], index: 0, kind: input, shape index: {}]
  %s1 = inlined_call_operand.hbm [shape: f32[2,4,256], index: 1, kind: input, shape index: {}]
  %s2 = inlined_call_operand.vmem [shape: f32[4,4], index: 2, kind: input, shape index: {}]
  %s3 = inlined_call_operand.vmem [shape: f32[4,4], index: 3, kind: input, shape index: {}]
  %s4 = inlined_call_operand.vmem [shape: f32[4,1], index: 4, kind: input, shape index: {}]
  %s5 = inlined_call_operand.vmem [shape: f32[4,4], index: 5, kind: input, shape index: {}]
  %s6 = inlined_call_operand.vmem [shape: f32[4,1], index: 6, kind: input, shape index: {}]
  %s7 = inlined_call_operand.hbm [shape: f32[2,4,256], index: 7, kind: output, shape index: {}]
  %s8 = sld [smem:[#allocation0]]
  $region69: #{tpu_custom_call.1} parent=0
    _
  %s10 = ssub.s32 1, %s8
  %s11 = scalar_select 0, %s10, %s8
  $region1: #{tpu_custom_call.1} parent=0
    #allocation2 [shape = 'u8[8192]{0}', space=vmem, size = 0x2000, scoped, tag = 'input window, operand 0']
    #allocation3 [shape = 's32[2]{0}', space=sflag, size = 0x8, scoped, tag = 'scoped memory for tpu_custom_call.1']
    #allocation4 [shape = 's32[2]{0}', space=sflag, size = 0x8, scoped, tag = 'scoped memory for tpu_custom_call.1']
    #allocation5 [shape = 'u8[8192]{0}', space=vmem, size = 0x2000, scoped, tag = 'input window, operand 1']
    #allocation6 [shape = 's32[2]{0}', space=sflag, size = 0x8, scoped, tag = 'scoped memory for tpu_custom_call.1']
    #allocation7 [shape = 'u8[8192]{0}', space=vmem, size = 0x2000, scoped, tag = 'output window, operand 0']
    %12 = vsyncpa [#allocation3], 0
    %s13 = scalar_lea.sflag [#allocation3], 1
    %14 = vsyncpa %s13, 0
    %15 = vsyncpa [#allocation6], 0
    %s16 = scalar_lea.sflag [#allocation6], 1
    %17 = vsyncpa %s16, 0
    %18 = vsyncpa [#allocation4], 0
    %s19 = scalar_lea.sflag [#allocation4], 1
    %20 = vsyncpa %s19, 0
    loop: start=0, step=1, limit=4
    $region2: #{tpu_custom_call.1} parent=1 // loop_pre_header
      _
    $region3: #{tpu_custom_call.1} parent=1 // loop_header
      %s22 = sphi 0, %s26
      %p23 = scmp.ge.s32.totalorder %s22, 4
      %s29 = sphi 0, %s41
      %s30 = sphi 0, %s37
      %s31 = sphi 0, %s29
      %s32 = sphi 0, %s30
      %s33 = sphi 0, %s31
      %s34 = sphi 0, %s32
      %s46 = sphi 0, %s48
      %s49 = sphi 0, %s46
      %s50 = sphi 0, %s49
      %s66 = sphi 0, %s50
      %s74 = sphi 0, %s76
      %s77 = sphi 0, %s74
      %s78 = sphi 0, %s77
      %s94 = sphi 0, %s78
      %s98 = sphi 0, %s98
      %s100 = sphi 0, %s98
      %s101 = sphi 0, %s100
      %s115 = sphi 0, %s101
      %s119 = sphi 0, %s119
      %s121 = sphi 0, %s119
      %s122 = sphi 0, %s121
      %s136 = sphi 0, %s122
      %s140 = sphi 0, %s140
      %s142 = sphi 0, %s140
      %s143 = sphi 0, %s142
      %s157 = sphi 0, %s143
      %s161 = sphi 0, %s161
      %s163 = sphi 0, %s161
      %s164 = sphi 0, %s163
      %s178 = sphi 0, %s164
      %s182 = sphi 0, %s182
      %s184 = sphi 0, %s182
      %s185 = sphi 0, %s184
      %s199 = sphi 0, %s185
      %s207 = sphi 0, %s209
      %s210 = sphi 0, %s207
      %s211 = sphi 0, %s210
      %s227 = sphi 0, %s211
    $region4: #{tpu_custom_call.1} parent=1 // loop_header_branch
      %25 = sbr.rel (%p23) target = $region8
    $region5: #{tpu_custom_call.1} parent=1 // loop_body
      %s27 = ssub.s32 %s22, 1
      %s28 = ssub.s32 %s22, 2
      %s35 = sadd.s32 1, %s30
      %p36 = scmp.ge.s32.totalorder %s35, 1
      %s37 = scalar_select %p36, 0, %s35
      %s38 = sadd.s32 1, %s29
      %s39 = scalar_select %p36, %s38, %s29
      %p40 = scmp.ge.s32.totalorder %s39, 2
      %s41 = scalar_select %p40, 0, %s39
      %s42 = ssub.s32 %s29, %s41
      %s43 = ssub.s32 %s30, %s37
      %s44 = sor.u32 %s42, %s43
      %p45 = scmp.eq.s32.totalorder %s44, 0
      %s47 = sadd.s32 %s46, 1
      %s48 = scalar_select %p45, %s46, %s47
      %p51 = pneg %p45
      %p52 = scmp.eq.s32.totalorder %s22, 1
      %p53 = por %p51, %p52
      %p54 = scmp.ne.s32.totalorder %s46, %s49
      %p55 = scmp.eq.s32.totalorder %s22, 0
      %p56 = por %p54, %p55
      %p57 = scmp.ne.s32.totalorder %s46, %s49
      %p58 = scmp.eq.s32.totalorder %s27, 1
      %p59 = por %p57, %p58
      %p60 = scmp.ne.s32.totalorder %s49, %s50
      %p61 = scmp.eq.s32.totalorder %s27, 0
      %p62 = por %p60, %p61
      %p63 = scmp.ne.s32.totalorder %s49, %s50
      %p64 = scmp.eq.s32.totalorder %s28, 1
      %p65 = por %p63, %p64
      %p67 = scmp.ne.s32.totalorder %s50, %s66
      %p68 = scmp.eq.s32.totalorder %s28, 0
      %p69 = por %p67, %p68
      %s70 = ssub.s32 %s29, %s41
      %s71 = ssub.s32 %s30, %s37
      %s72 = sor.u32 %s70, %s71
      %p73 = scmp.eq.s32.totalorder %s72, 0
      %s75 = sadd.s32 %s74, 1
      %s76 = scalar_select %p73, %s74, %s75
      %p79 = pneg %p73
      %p80 = scmp.eq.s32.totalorder %s22, 1
      %p81 = por %p79, %p80
      %p82 = scmp.ne.s32.totalorder %s74, %s77
      %p83 = scmp.eq.s32.totalorder %s22, 0
      %p84 = por %p82, %p83
      %p85 = scmp.ne.s32.totalorder %s74, %s77
      %p86 = scmp.eq.s32.totalorder %s27, 1
      %p87 = por %p85, %p86
      %p88 = scmp.ne.s32.totalorder %s77, %s78
      %p89 = scmp.eq.s32.totalorder %s27, 0
      %p90 = por %p88, %p89
      %p91 = scmp.ne.s32.totalorder %s77, %s78
      %p92 = scmp.eq.s32.totalorder %s28, 1
      %p93 = por %p91, %p92
      %p95 = scmp.ne.s32.totalorder %s78, %s94
      %p96 = scmp.eq.s32.totalorder %s28, 0
      %p97 = por %p95, %p96
      %s99 = sadd.s32 %s98, 1
      %p102 = scmp.eq.s32.totalorder %s22, 1
      %p103 = scmp.ne.s32.totalorder %s98, %s100
      %p104 = scmp.eq.s32.totalorder %s22, 0
      %p105 = por %p103, %p104
      %p106 = scmp.ne.s32.totalorder %s98, %s100
      %p107 = scmp.eq.s32.totalorder %s27, 1
      %p108 = por %p106, %p107
      %p109 = scmp.ne.s32.totalorder %s100, %s101
      %p110 = scmp.eq.s32.totalorder %s27, 0
      %p111 = por %p109, %p110
      %p112 = scmp.ne.s32.totalorder %s100, %s101
      %p113 = scmp.eq.s32.totalorder %s28, 1
      %p114 = por %p112, %p113
      %p116 = scmp.ne.s32.totalorder %s101, %s115
      %p117 = scmp.eq.s32.totalorder %s28, 0
      %p118 = por %p116, %p117
      %s120 = sadd.s32 %s119, 1
      %p123 = scmp.eq.s32.totalorder %s22, 1
      %p124 = scmp.ne.s32.totalorder %s119, %s121
      %p125 = scmp.eq.s32.totalorder %s22, 0
      %p126 = por %p124, %p125
      %p127 = scmp.ne.s32.totalorder %s119, %s121
      %p128 = scmp.eq.s32.totalorder %s27, 1
      %p129 = por %p127, %p128
      %p130 = scmp.ne.s32.totalorder %s121, %s122
      %p131 = scmp.eq.s32.totalorder %s27, 0
      %p132 = por %p130, %p131
      %p133 = scmp.ne.s32.totalorder %s121, %s122
      %p134 = scmp.eq.s32.totalorder %s28, 1
      %p135 = por %p133, %p134
      %p137 = scmp.ne.s32.totalorder %s122, %s136
      %p138 = scmp.eq.s32.totalorder %s28, 0
      %p139 = por %p137, %p138
      %s141 = sadd.s32 %s140, 1
      %p144 = scmp.eq.s32.totalorder %s22, 1
      %p145 = scmp.ne.s32.totalorder %s140, %s142
      %p146 = scmp.eq.s32.totalorder %s22, 0
      %p147 = por %p145, %p146
      %p148 = scmp.ne.s32.totalorder %s140, %s142
      %p149 = scmp.eq.s32.totalorder %s27, 1
      %p150 = por %p148, %p149
      %p151 = scmp.ne.s32.totalorder %s142, %s143
      %p152 = scmp.eq.s32.totalorder %s27, 0
      %p153 = por %p151, %p152
      %p154 = scmp.ne.s32.totalorder %s142, %s143
      %p155 = scmp.eq.s32.totalorder %s28, 1
      %p156 = por %p154, %p155
      %p158 = scmp.ne.s32.totalorder %s143, %s157
      %p159 = scmp.eq.s32.totalorder %s28, 0
      %p160 = por %p158, %p159
      %s162 = sadd.s32 %s161, 1
      %p165 = scmp.eq.s32.totalorder %s22, 1
      %p166 = scmp.ne.s32.totalorder %s161, %s163
      %p167 = scmp.eq.s32.totalorder %s22, 0
      %p168 = por %p166, %p167
      %p169 = scmp.ne.s32.totalorder %s161, %s163
      %p170 = scmp.eq.s32.totalorder %s27, 1
      %p171 = por %p169, %p170
      %p172 = scmp.ne.s32.totalorder %s163, %s164
      %p173 = scmp.eq.s32.totalorder %s27, 0
      %p174 = por %p172, %p173
      %p175 = scmp.ne.s32.totalorder %s163, %s164
      %p176 = scmp.eq.s32.totalorder %s28, 1
      %p177 = por %p175, %p176
      %p179 = scmp.ne.s32.totalorder %s164, %s178
      %p180 = scmp.eq.s32.totalorder %s28, 0
      %p181 = por %p179, %p180
      %s183 = sadd.s32 %s182, 1
      %p186 = scmp.eq.s32.totalorder %s22, 1
      %p187 = scmp.ne.s32.totalorder %s182, %s184
      %p188 = scmp.eq.s32.totalorder %s22, 0
      %p189 = por %p187, %p188
      %p190 = scmp.ne.s32.totalorder %s182, %s184
      %p191 = scmp.eq.s32.totalorder %s27, 1
      %p192 = por %p190, %p191
      %p193 = scmp.ne.s32.totalorder %s184, %s185
      %p194 = scmp.eq.s32.totalorder %s27, 0
      %p195 = por %p193, %p194
      %p196 = scmp.ne.s32.totalorder %s184, %s185
      %p197 = scmp.eq.s32.totalorder %s28, 1
      %p198 = por %p196, %p197
      %p200 = scmp.ne.s32.totalorder %s185, %s199
      %p201 = scmp.eq.s32.totalorder %s28, 0
      %p202 = por %p200, %p201
      %s203 = ssub.s32 %s29, %s41
      %s204 = ssub.s32 %s30, %s37
      %s205 = sor.u32 %s203, %s204
      %p206 = scmp.eq.s32.totalorder %s205, 0
      %s208 = sadd.s32 %s207, 1
      %s209 = scalar_select %p206, %s207, %s208
      %p212 = pneg %p206
      %p213 = scmp.eq.s32.totalorder %s22, 1
      %p214 = por %p212, %p213
      %p215 = scmp.ne.s32.totalorder %s207, %s210
      %p216 = scmp.eq.s32.totalorder %s22, 0
      %p217 = por %p215, %p216
      %p218 = scmp.ne.s32.totalorder %s207, %s210
      %p219 = scmp.eq.s32.totalorder %s27, 1
      %p220 = por %p218, %p219
      %p221 = scmp.ne.s32.totalorder %s210, %s211
      %p222 = scmp.eq.s32.totalorder %s27, 0
      %p223 = por %p221, %p222
      %p224 = scmp.ne.s32.totalorder %s210, %s211
      %p225 = scmp.eq.s32.totalorder %s28, 1
      %p226 = por %p224, %p225
      %p228 = scmp.ne.s32.totalorder %s211, %s227
      %p229 = scmp.eq.s32.totalorder %s28, 0
      %p230 = por %p228, %p229
      %p231 = scmp.le.s32.totalorder 1, %s22
      %p232 = scmp.lt.s32.totalorder %s22, 3
      %p233 = pnand %p231, %p232
      %p234 = pneg %p233
      // Predicated region
      $region9: #{tpu_custom_call.1} parent=5 // pred_check
        _
      $region10: #{tpu_custom_call.1} parent=5 // pred_check_branch
        %236 = sbr.rel (%p233) target = $region12
      $region11: #{tpu_custom_call.1} parent=5 // pred_region
        %s237 = ssub.s32 %s22, 1
        // Predicated region
        $region13: #{tpu_custom_call.1} parent=11 // pred_check
          %p238 = pneg %p111
        $region14: #{tpu_custom_call.1} parent=11 // pred_check_branch
          %240 = sbr.rel (%p238) target = $region16
        $region15: #{tpu_custom_call.1} parent=11 // pred_region
          _
        $region16: #{tpu_custom_call.1} parent=11 // pred_fallthru
          _
        // Predicated region
        $region17: #{tpu_custom_call.1} parent=11 // pred_check
          %p241 = pneg %p132
        $region18: #{tpu_custom_call.1} parent=11 // pred_check_branch
          %243 = sbr.rel (%p241) target = $region20
        $region19: #{tpu_custom_call.1} parent=11 // pred_region
          _
        $region20: #{tpu_custom_call.1} parent=11 // pred_fallthru
          _
        // Predicated region
        $region21: #{tpu_custom_call.1} parent=11 // pred_check
          %p244 = pneg %p153
        $region22: #{tpu_custom_call.1} parent=11 // pred_check_branch
          %246 = sbr.rel (%p244) target = $region24
        $region23: #{tpu_custom_call.1} parent=11 // pred_region
          _
        $region24: #{tpu_custom_call.1} parent=11 // pred_fallthru
          _
        // Predicated region
        $region25: #{tpu_custom_call.1} parent=11 // pred_check
          %p247 = pneg %p174
        $region26: #{tpu_custom_call.1} parent=11 // pred_check_branch
          %249 = sbr.rel (%p247) target = $region28
        $region27: #{tpu_custom_call.1} parent=11 // pred_region
          _
        $region28: #{tpu_custom_call.1} parent=11 // pred_fallthru
          _
        // Predicated region
        $region29: #{tpu_custom_call.1} parent=11 // pred_check
          %p250 = pneg %p195
        $region30: #{tpu_custom_call.1} parent=11 // pred_check_branch
          %252 = sbr.rel (%p250) target = $region32
        $region31: #{tpu_custom_call.1} parent=11 // pred_region
          _
        $region32: #{tpu_custom_call.1} parent=11 // pred_fallthru
          _
      $region12: #{tpu_custom_call.1} parent=5 // pred_fallthru
        _
      %p253 = scmp.lt.s32.totalorder %s22, 2
      // Predicated region
      $region33: #{tpu_custom_call.1} parent=5 // pred_check
        %p254 = pneg %p253
      $region34: #{tpu_custom_call.1} parent=5 // pred_check_branch
        %256 = sbr.rel (%p254) target = $region36
      $region35: #{tpu_custom_call.1} parent=5 // pred_region
        // Predicated region
        $region37: #{tpu_custom_call.1} parent=35 // pred_check
          %p257 = pneg %p56
        $region38: #{tpu_custom_call.1} parent=35 // pred_check_branch
          %259 = sbr.rel (%p257) target = $region40
        $region39: #{tpu_custom_call.1} parent=35 // pred_region
          %s260 = sand.u32 %s46, 1
          %s261 = scalar_lea.sflag [#allocation3], %s260
          %s262 = sand.u32 %s46, 1
          %s263 = smul.addr %s262, 8
          %s264 = scalar_lea.vmem [#allocation2], %s263
          %s265 = smul.u32 2, %s30
          %s267 = ssub.s32 128, 128
          %268 = vsyncadd %s261, %s267
          %s269 = smul.addr %s29, 2
          %s270 = sadd.s32 %s265, %s269
          %s271 = smul.addr %s270, 64
          %s272 = scalar_lea.hbm %s0, %s271
          %s274 = sshll.u32 %s264, 4
          %s275 = int_to_ptr.vmem [resolvable:$true] %s274
          %277 = dma.hbm_to_vmem [thread:$0]  %s272, 128, %s275, %s261
        $region40: #{tpu_custom_call.1} parent=35 // pred_fallthru
          _
        // Predicated region
        $region41: #{tpu_custom_call.1} parent=35 // pred_check
          %p278 = pneg %p84
        $region42: #{tpu_custom_call.1} parent=35 // pred_check_branch
          %280 = sbr.rel (%p278) target = $region44
        $region43: #{tpu_custom_call.1} parent=35 // pred_region
          %s281 = sand.u32 %s74, 1
          %s282 = scalar_lea.sflag [#allocation6], %s281
          %s283 = sand.u32 %s74, 1
          %s284 = smul.addr %s283, 8
          %s285 = scalar_lea.vmem [#allocation5], %s284
          %s286 = smul.u32 2, %s30
          %s288 = ssub.s32 128, 128
          %289 = vsyncadd %s282, %s288
          %s290 = smul.addr %s29, 2
          %s291 = sadd.s32 %s286, %s290
          %s292 = smul.addr %s291, 64
          %s293 = scalar_lea.hbm %s1, %s292
          %s295 = sshll.u32 %s285, 4
          %s296 = int_to_ptr.vmem [resolvable:$true] %s295
          %298 = dma.hbm_to_vmem [thread:$0]  %s293, 128, %s296, %s282
        $region44: #{tpu_custom_call.1} parent=35 // pred_fallthru
          _
      $region36: #{tpu_custom_call.1} parent=5 // pred_fallthru
        _
      %p299 = scmp.le.s32.totalorder 1, %s22
      %p300 = scmp.lt.s32.totalorder %s22, 3
      %p301 = pnand %p299, %p300
      %p302 = pneg %p301
      // Predicated region
      $region45: #{tpu_custom_call.1} parent=5 // pred_check
        _
      $region46: #{tpu_custom_call.1} parent=5 // pred_check_branch
        %304 = sbr.rel (%p301) target = $region48
      $region47: #{tpu_custom_call.1} parent=5 // pred_region
        %s305 = ssub.s32 %s22, 1
        %s306 = sand.u32 %s49, 1
        %s307 = scalar_lea.sflag [#allocation3], %s306
        %s308 = sand.u32 %s49, 1
        %s309 = smul.addr %s308, 8
        %s310 = scalar_lea.vmem [#allocation2], %s309
        // Predicated region
        $region49: #{tpu_custom_call.1} parent=47 // pred_check
          %p311 = pneg %p62
        $region50: #{tpu_custom_call.1} parent=47 // pred_check_branch
          %313 = sbr.rel (%p311) target = $region52
        $region51: #{tpu_custom_call.1} parent=47 // pred_region
          %314 = dma.done %s307, 128
        $region52: #{tpu_custom_call.1} parent=47 // pred_fallthru
          _
        %s315 = sand.u32 %s77, 1
        %s316 = scalar_lea.sflag [#allocation6], %s315
        %s317 = sand.u32 %s77, 1
        %s318 = smul.addr %s317, 8
        %s319 = scalar_lea.vmem [#allocation5], %s318
        // Predicated region
        $region53: #{tpu_custom_call.1} parent=47 // pred_check
          %p320 = pneg %p90
        $region54: #{tpu_custom_call.1} parent=47 // pred_check_branch
          %322 = sbr.rel (%p320) target = $region56
        $region55: #{tpu_custom_call.1} parent=47 // pred_region
          %323 = dma.done %s316, 128
        $region56: #{tpu_custom_call.1} parent=47 // pred_fallthru
          _
        %s324 = sand.u32 %s49, 1
        %s325 = scalar_lea.sflag [#allocation3], %s324
        %s326 = sand.u32 %s49, 1
        %s327 = smul.addr %s326, 8
        %s328 = scalar_lea.vmem [#allocation2], %s327
        %p329 = pneg %p62
        %p330 = pneg %p59
        %s331 = sand.u32 %s77, 1
        %s332 = scalar_lea.sflag [#allocation6], %s331
        %s333 = sand.u32 %s77, 1
        %s334 = smul.addr %s333, 8
        %s335 = scalar_lea.vmem [#allocation5], %s334
        %p336 = pneg %p90
        %p337 = pneg %p87
        %p338 = pneg %p111
        %p339 = pneg %p108
        %p340 = pneg %p132
        %p341 = pneg %p129
        %p342 = pneg %p153
        %p343 = pneg %p150
        %p344 = pneg %p174
        %p345 = pneg %p171
        %p346 = pneg %p195
        %p347 = pneg %p192
        %p348 = pneg %p223
        %p349 = pneg %p220
        %s350 = sand.u32 %s210, 1
        %s351 = scalar_lea.sflag [#allocation4], %s350
        %s352 = sand.u32 %s210, 1
        %s353 = smul.addr %s352, 8
        %s354 = scalar_lea.vmem [#allocation7], %s353
        %s355 = smul.u32 2, %s32
        %s356 = smul.u32 2, %s32
        %s357 = smul.u32 2, %s32
        %v358 = vld [vmem:[%s310] sm:$0xff]
        %v359 = vld [vmem:[%s319] sm:$0xff]
        %v360 = vld [vmem:[%s2] sm:$0xf]
        %v361 = vld [vmem:[%s3] sm:$0xf]
        %v363 = vcombine.high %v359, %v359
        %vm364 = vcmask 31744
        %v366 = vsel %vm364, %v361, 0
        %vm368 = vcmask 1043456
        %v369 = vsel %vm368, %v359, 0
        %v371 = vsel %vm368, %v363, 0
        %373 = vmatprep.subr.mxu0 %v371
        %374 = vmatpush1.msra.mxu0 %v369
        %375 = vmatprep.subr.mxu0 0.0
        %376 = vmatpush1.msra.mxu0 0.0
        %377 = vmatprep.subr.mxu0 0.0
        %378 = vmatpush1.msra.mxu0 0.0
        %379 = vmatprep.subr.mxu0 0.0
        %380 = vmatpush1.msra.mxu0 0.0
        %381 = vmatprep.subr.mxu0 0.0
        %382 = vmatpush1.msra.mxu0 0.0
        %383 = vmatprep.subr.mxu0 0.0
        %384 = vmatpush1.msra.mxu0 0.0
        %385 = vmatprep.subr.mxu0 0.0
        %386 = vmatpush1.msra.mxu0 0.0
        %387 = vmatprep.subr.mxu0 0.0
        %388 = vmatpush1.msra.mxu0 0.0
        %389 = vmatprep.subr.mxu0 0.0
        %390 = vmatpush1.msra.mxu0 0.0
        %391 = vmatprep.subr.mxu0 0.0
        %392 = vmatpush1.msra.mxu0 0.0
        %393 = vmatprep.subr.mxu0 0.0
        %394 = vmatpush1.msra.mxu0 0.0
        %395 = vmatprep.subr.mxu0 0.0
        %396 = vmatpush1.msra.mxu0 0.0
        %397 = vmatprep.subr.mxu0 0.0
        %398 = vmatpush1.msra.mxu0 0.0
        %399 = vmatprep.subr.mxu0 0.0
        %400 = vmatpush1.msra.mxu0 0.0
        %401 = vmatprep.subr.mxu0 0.0
        %402 = vmatpush1.msra.mxu0 0.0
        %403 = vmatprep.subr.mxu0 0.0
        %404 = vmatpush1.msra.mxu0 0.0
        %405 = vmatprep.subr.mxu0 0.0
        %406 = vmatpush1.msra.mxu0 0.0
        %407 = vmatprep.subr.mxu0 0.0
        %408 = vmatpush1.msra.mxu0 0.0
        %409 = vmatprep.subr.mxu0 0.0
        %410 = vmatpush1.msra.mxu0 0.0
        %411 = vmatprep.subr.mxu0 0.0
        %412 = vmatpush1.msra.mxu0 0.0
        %413 = vmatprep.subr.mxu0 0.0
        %414 = vmatpush1.msra.mxu0 0.0
        %415 = vmatprep.subr.mxu0 0.0
        %416 = vmatpush1.msra.mxu0 0.0
        %417 = vmatprep.subr.mxu0 0.0
        %418 = vmatpush1.msra.mxu0 0.0
        %419 = vmatprep.subr.mxu0 0.0
        %420 = vmatpush1.msra.mxu0 0.0
        %421 = vmatprep.subr.mxu0 0.0
        %422 = vmatpush1.msra.mxu0 0.0
        %423 = vmatprep.subr.mxu0 0.0
        %424 = vmatpush1.msra.mxu0 0.0
        %425 = vmatprep.subr.mxu0 0.0
        %426 = vmatpush1.msra.mxu0 0.0
        %427 = vmatprep.subr.mxu0 0.0
        %428 = vmatpush1.msra.mxu0 0.0
        %429 = vmatprep.subr.mxu0 0.0
        %430 = vmatpush1.msra.mxu0 0.0
        %431 = vmatprep.subr.mxu0 0.0
        %432 = vmatpush1.msra.mxu0 0.0
        %433 = vmatprep.subr.mxu0 0.0
        %434 = vmatpush1.msra.mxu0 0.0
        %435 = vmatprep.subr.mxu0 0.0
        %436 = vmatpush1.msra.mxu0 0.0
        %437 = vmatprep.mubr.f32.mxu0 0.0
        %438 = vmatmul.mubr.f32.gmra.mrb[0].mxu0 %v366
        %v439 = vpop.f32.mrb[0].mxu0
        %v440 = vadd.f32 0.0, %v439
        %v441 = vpop.f32.mrb[0].mxu0
        %v442 = vadd.f32 0.0, %v441
        %443 = vdwg.mxu0
        %v445 = vcombine.high %v358, %v358
        %v447 = vsel %vm364, %v360, 0
        %v449 = vsel %vm368, %v358, 0
        %v451 = vsel %vm368, %v445, 0
        %453 = vmatprep.subr.mxu0 %v451
        %454 = vmatpush1.msra.mxu0 %v449
        %455 = vmatprep.subr.mxu0 0.0
        %456 = vmatpush1.msra.mxu0 0.0
        %457 = vmatprep.subr.mxu0 0.0
        %458 = vmatpush1.msra.mxu0 0.0
        %459 = vmatprep.subr.mxu0 0.0
        %460 = vmatpush1.msra.mxu0 0.0
        %461 = vmatprep.subr.mxu0 0.0
        %462 = vmatpush1.msra.mxu0 0.0
        %463 = vmatprep.subr.mxu0 0.0
        %464 = vmatpush1.msra.mxu0 0.0
        %465 = vmatprep.subr.mxu0 0.0
        %466 = vmatpush1.msra.mxu0 0.0
        %467 = vmatprep.subr.mxu0 0.0
        %468 = vmatpush1.msra.mxu0 0.0
        %469 = vmatprep.subr.mxu0 0.0
        %470 = vmatpush1.msra.mxu0 0.0
        %471 = vmatprep.subr.mxu0 0.0
        %472 = vmatpush1.msra.mxu0 0.0
        %473 = vmatprep.subr.mxu0 0.0
        %474 = vmatpush1.msra.mxu0 0.0
        %475 = vmatprep.subr.mxu0 0.0
        %476 = vmatpush1.msra.mxu0 0.0
        %477 = vmatprep.subr.mxu0 0.0
        %478 = vmatpush1.msra.mxu0 0.0
        %479 = vmatprep.subr.mxu0 0.0
        %480 = vmatpush1.msra.mxu0 0.0
        %481 = vmatprep.subr.mxu0 0.0
        %482 = vmatpush1.msra.mxu0 0.0
        %483 = vmatprep.subr.mxu0 0.0
        %484 = vmatpush1.msra.mxu0 0.0
        %485 = vmatprep.subr.mxu0 0.0
        %486 = vmatpush1.msra.mxu0 0.0
        %487 = vmatprep.subr.mxu0 0.0
        %488 = vmatpush1.msra.mxu0 0.0
        %489 = vmatprep.subr.mxu0 0.0
        %490 = vmatpush1.msra.mxu0 0.0
        %491 = vmatprep.subr.mxu0 0.0
        %492 = vmatpush1.msra.mxu0 0.0
        %493 = vmatprep.subr.mxu0 0.0
        %494 = vmatpush1.msra.mxu0 0.0
        %495 = vmatprep.subr.mxu0 0.0
        %496 = vmatpush1.msra.mxu0 0.0
        %497 = vmatprep.subr.mxu0 0.0
        %498 = vmatpush1.msra.mxu0 0.0
        %499 = vmatprep.subr.mxu0 0.0
        %500 = vmatpush1.msra.mxu0 0.0
        %501 = vmatprep.subr.mxu0 0.0
        %502 = vmatpush1.msra.mxu0 0.0
        %503 = vmatprep.subr.mxu0 0.0
        %504 = vmatpush1.msra.mxu0 0.0
        %505 = vmatprep.subr.mxu0 0.0
        %506 = vmatpush1.msra.mxu0 0.0
        %507 = vmatprep.subr.mxu0 0.0
        %508 = vmatpush1.msra.mxu0 0.0
        %509 = vmatprep.subr.mxu0 0.0
        %510 = vmatpush1.msra.mxu0 0.0
        %511 = vmatprep.subr.mxu0 0.0
        %512 = vmatpush1.msra.mxu0 0.0
        %513 = vmatprep.subr.mxu0 0.0
        %514 = vmatpush1.msra.mxu0 0.0
        %515 = vmatprep.subr.mxu0 0.0
        %516 = vmatpush1.msra.mxu0 0.0
        %517 = vmatprep.mubr.f32.mxu0 0.0
        %518 = vmatmul.mubr.f32.gmra.mrb[0].mxu0 %v447
        %v519 = vpop.f32.mrb[0].mxu0
        %v520 = vadd.f32 %v440, %v519
        %v521 = vpop.f32.mrb[0].mxu0
        %v522 = vadd.f32 %v442, %v521
        %523 = vdwg.mxu0
        %v524 = vld [vmem:[%s4] sm:$0xf]
        %526 = vset.pattern.permute.xlu0 0
        %527 = vperm.xlu0 %526, %v524
        %v528 = vpop.permute.xlu0 %527
        %v530 = vadd.f32 %v520, %v528
        %v531 = vadd.f32 %v522, %v528
        %vm532 = vcmp.ge.f32.partialorder %v530, 0.0
        %vm533 = vcmp.ge.f32.partialorder %v531, 0.0
        %v534 = vmul.f32 %v530, 0.1
        %v535 = vmul.f32 %v531, 0.1
        %v536 = vsel %vm532, %v530, %v534
        %v537 = vsel %vm533, %v531, %v535
        %v538 = vld [vmem:[%s5] sm:$0xf]
        %v539 = vld [vmem:[%s6] sm:$0xf]
        %541 = vset.pattern.permute.xlu0 0
        %542 = vperm.xlu0 %541, %v539
        %v543 = vpop.permute.xlu0 %542
        %v546 = vsel %vm364, %v538, 0
        %v549 = vsel %vm368, %v536, 0
        %v552 = vsel %vm368, %v537, 0
        %554 = vmatprep.subr.mxu0 %v552
        %555 = vmatpush1.msra.mxu0 %v549
        %556 = vmatprep.subr.mxu0 0.0
        %557 = vmatpush1.msra.mxu0 0.0
        %558 = vmatprep.subr.mxu0 0.0
        %559 = vmatpush1.msra.mxu0 0.0
        %560 = vmatprep.subr.mxu0 0.0
        %561 = vmatpush1.msra.mxu0 0.0
        %562 = vmatprep.subr.mxu0 0.0
        %563 = vmatpush1.msra.mxu0 0.0
        %564 = vmatprep.subr.mxu0 0.0
        %565 = vmatpush1.msra.mxu0 0.0
        %566 = vmatprep.subr.mxu0 0.0
        %567 = vmatpush1.msra.mxu0 0.0
        %568 = vmatprep.subr.mxu0 0.0
        %569 = vmatpush1.msra.mxu0 0.0
        %570 = vmatprep.subr.mxu0 0.0
        %571 = vmatpush1.msra.mxu0 0.0
        %572 = vmatprep.subr.mxu0 0.0
        %573 = vmatpush1.msra.mxu0 0.0
        %574 = vmatprep.subr.mxu0 0.0
        %575 = vmatpush1.msra.mxu0 0.0
        %576 = vmatprep.subr.mxu0 0.0
        %577 = vmatpush1.msra.mxu0 0.0
        %578 = vmatprep.subr.mxu0 0.0
        %579 = vmatpush1.msra.mxu0 0.0
        %580 = vmatprep.subr.mxu0 0.0
        %581 = vmatpush1.msra.mxu0 0.0
        %582 = vmatprep.subr.mxu0 0.0
        %583 = vmatpush1.msra.mxu0 0.0
        %584 = vmatprep.subr.mxu0 0.0
        %585 = vmatpush1.msra.mxu0 0.0
        %586 = vmatprep.subr.mxu0 0.0
        %587 = vmatpush1.msra.mxu0 0.0
        %588 = vmatprep.subr.mxu0 0.0
        %589 = vmatpush1.msra.mxu0 0.0
        %590 = vmatprep.subr.mxu0 0.0
        %591 = vmatpush1.msra.mxu0 0.0
        %592 = vmatprep.subr.mxu0 0.0
        %593 = vmatpush1.msra.mxu0 0.0
        %594 = vmatprep.subr.mxu0 0.0
        %595 = vmatpush1.msra.mxu0 0.0
        %596 = vmatprep.subr.mxu0 0.0
        %597 = vmatpush1.msra.mxu0 0.0
        %598 = vmatprep.subr.mxu0 0.0
        %599 = vmatpush1.msra.mxu0 0.0
        %600 = vmatprep.subr.mxu0 0.0
        %601 = vmatpush1.msra.mxu0 0.0
        %602 = vmatprep.subr.mxu0 0.0
        %603 = vmatpush1.msra.mxu0 0.0
        %604 = vmatprep.subr.mxu0 0.0
        %605 = vmatpush1.msra.mxu0 0.0
        %606 = vmatprep.subr.mxu0 0.0
        %607 = vmatpush1.msra.mxu0 0.0
        %608 = vmatprep.subr.mxu0 0.0
        %609 = vmatpush1.msra.mxu0 0.0
        %610 = vmatprep.subr.mxu0 0.0
        %611 = vmatpush1.msra.mxu0 0.0
        %612 = vmatprep.subr.mxu0 0.0
        %613 = vmatpush1.msra.mxu0 0.0
        %614 = vmatprep.subr.mxu0 0.0
        %615 = vmatpush1.msra.mxu0 0.0
        %616 = vmatprep.subr.mxu0 0.0
        %617 = vmatpush1.msra.mxu0 0.0
        %618 = vmatprep.mubr.f32.mxu0 0.0
        %619 = vmatmul.mubr.f32.gmra.mrb[0].mxu0 %v546
        %v620 = vpop.f32.mrb[0].mxu0
        %v621 = vadd.f32 %v543, %v620
        %v622 = vpop.f32.mrb[0].mxu0
        %v623 = vadd.f32 %v543, %v622
        %624 = vdwg.mxu0
        %v627 = vcombine.low %v621, %v623
        %629 = vst [vmem:[%s354] sm:$0xff] %v627
        %s630 = sand.u32 %s210, 1
        %s631 = scalar_lea.sflag [#allocation4], %s630
        %s632 = sand.u32 %s210, 1
        %s633 = smul.addr %s632, 8
        %s634 = scalar_lea.vmem [#allocation7], %s633
        // Predicated region
        $region57: #{tpu_custom_call.1} parent=47 // pred_check
          %p635 = pneg %p220
        $region58: #{tpu_custom_call.1} parent=47 // pred_check_branch
          %637 = sbr.rel (%p635) target = $region60
        $region59: #{tpu_custom_call.1} parent=47 // pred_region
          %s638 = smul.u32 2, %s32
          %s640 = ssub.s32 128, 128
          %641 = vsyncadd %s631, %s640
          %s642 = smul.addr %s31, 2
          %s643 = sadd.s32 %s638, %s642
          %s644 = smul.addr %s643, 64
          %s645 = scalar_lea.hbm %s7, %s644
          %s647 = sshll.u32 %s634, 4
          %s648 = int_to_ptr.vmem [resolvable:$true] %s647
          %650 = dma.vmem_to_hbm [thread:$0]  %s648, 128, %s645, %s631
        $region60: #{tpu_custom_call.1} parent=47 // pred_fallthru
          _
      $region48: #{tpu_custom_call.1} parent=5 // pred_fallthru
        _
      %p651 = scmp.le.s32.totalorder 2, %s22
      // Predicated region
      $region61: #{tpu_custom_call.1} parent=5 // pred_check
        %p652 = pneg %p651
      $region62: #{tpu_custom_call.1} parent=5 // pred_check_branch
        %654 = sbr.rel (%p652) target = $region64
      $region63: #{tpu_custom_call.1} parent=5 // pred_region
        %s655 = ssub.s32 %s22, 2
        // Predicated region
        $region65: #{tpu_custom_call.1} parent=63 // pred_check
          %p656 = pneg %p226
        $region66: #{tpu_custom_call.1} parent=63 // pred_check_branch
          %658 = sbr.rel (%p656) target = $region68
        $region67: #{tpu_custom_call.1} parent=63 // pred_region
          %s659 = sand.u32 %s211, 1
          %s660 = scalar_lea.sflag [#allocation4], %s659
          %s661 = sand.u32 %s211, 1
          %s662 = smul.addr %s661, 8
          %s663 = scalar_lea.vmem [#allocation7], %s662
          %664 = dma.done %s660, 128
        $region68: #{tpu_custom_call.1} parent=63 // pred_fallthru
          _
      $region64: #{tpu_custom_call.1} parent=5 // pred_fallthru
        _
    $region6: #{tpu_custom_call.1} parent=1 // loop_footer
      %s26 = sadd.s32 1, %s22
    $region7: #{tpu_custom_call.1} parent=1 // loop_footer_branch
      %21 = sbr.rel target = $region3
    $region8: #{tpu_custom_call.1} parent=1 // loop_exit
      _
    %665 = vsyncpa [#allocation3], 1
    %s666 = scalar_lea.sflag [#allocation3], 1
    %667 = vsyncpa %s666, 1
    %668 = vsyncpa [#allocation6], 1
    %s669 = scalar_lea.sflag [#allocation6], 1
    %670 = vsyncpa %s669, 1
    %671 = vsyncpa [#allocation4], 1
    %s672 = scalar_lea.sflag [#allocation4], 1
    %673 = vsyncpa %s672, 1

</llo_original>
